<compile_context>
chip_gen: v7x
topology: tpu7x:2x2x1
jax: 0.10.0
libtpu: 0.0.40
codegen_flags: <defaults>
</compile_context>

<pallas_src>
import functools

import jax
import jax.numpy as jnp
from jax.experimental import pallas as pl
from jax.experimental.pallas import tpu as pltpu


def _round_up(x, m):
    return ((x + m - 1) // m) * m


def _vmem_capacity_bytes():
    try:
        return int(pltpu.get_tpu_info().vmem_capacity_bytes)
    except Exception:
        return 128 << 20  # v5e/v6e default


def _linear_kernel(x_ref, w_ref, b_ref, o_ref, *rest, activate, out_valid, bn):
    # x_ref: (bm, bk) compute dtype; w_ref: (bk, bn) compute dtype ([IN, OUT]).
    # b_ref: (1, bn) fp32; o_ref: (bm, bn) fp32 (doubles as the accumulator).
    # softmax extras: lse_ref (bm, 1) fp32 out; m_sc / l_sc (bm, 1) fp32 scratch.
    j = pl.program_id(1)
    k = pl.program_id(2)
    nj = pl.num_programs(1)
    nk = pl.num_programs(2)

    @pl.when(k == 0)
    def _init():
        o_ref[...] = jnp.zeros_like(o_ref)

    # MXU matmul, fp32 accumulation directly into the resident output tile.
    o_ref[...] += jnp.dot(x_ref[...], w_ref[...], preferred_element_type=jnp.float32)

    @pl.when(k == nk - 1)
    def _finalize():
        # Single fp32 VPU pass: bias + activation (EUP handles tanh/exp).
        y = o_ref[...] + b_ref[...]
        if activate == "relu":
            y = jnp.maximum(y, 0.0)
        elif activate == "tanh":
            y = jnp.tanh(y)
        o_ref[...] = y

        if activate == "softmax":
            lse_ref, m_sc, l_sc = rest
            # Mask padded output columns (global index >= out_valid) to -inf so
            # they do not contribute to the streaming log-sum-exp.
            col = jax.lax.broadcasted_iota(jnp.int32, y.shape, 1) + j * bn
            ym = jnp.where(col < out_valid, y, -jnp.inf)

            @pl.when(j == 0)
            def _reset():
                m_sc[...] = jnp.full_like(m_sc, -jnp.inf)
                l_sc[...] = jnp.zeros_like(l_sc)

            m_prev = m_sc[...]
            m_new = jnp.maximum(m_prev, jnp.max(ym, axis=1, keepdims=True))
            l_sc[...] = (l_sc[...] * jnp.exp(m_prev - m_new)
                         + jnp.sum(jnp.exp(ym - m_new), axis=1, keepdims=True))
            m_sc[...] = m_new

            @pl.when(j == nj - 1)
            def _emit():
                lse_ref[...] = m_sc[...] + jnp.log(l_sc[...])


class PallasLinear:
    """Fused Linear (+ activation) with weight layout prep hoisted to init.

    Matches PyTorch nn.Linear: weight is [out_features, in_features].
    activate: None | "relu" | "tanh" | "softmax" (log_softmax over dim=1).
    compute_dtype: fp32 (default, matches PyTorch numerics) or bf16 for
    v6e/v7x MXU throughput (fp32 accumulation + fp32 epilogue either way).
    """

    def __init__(self, weight, bias, activate=None, *,
                 compute_dtype=jnp.float32, bn=None, bk=None, bm_cap=512):
        if activate not in (None, "relu", "tanh", "softmax"):
            raise ValueError(f"unknown activation function {activate}")
        self.activate = activate
        self.compute_dtype = jnp.dtype(compute_dtype)

        OUT, IN = weight.shape
        self.in_features = IN
        self.out_features = OUT

        # bf16 packs 2 rows per sublane -> 16-row alignment; fp32 -> 8.
        self._sub = 16 if self.compute_dtype == jnp.bfloat16 else 8
        self.bm_cap = _round_up(bm_cap, self._sub)

        n128 = _round_up(OUT, 128)
        k128 = _round_up(IN, 128)
        if bn is None:
            bn = min(1024, n128)
            # Keep >=2 parallel N blocks for v7x megacore when the row is wide
            # enough (harmless on single-TC v5e/v6e; softmax keeps N sequential).
            if activate != "softmax" and bn == n128 and n128 >= 256:
                bn = _round_up(n128 // 2, 128)
        bn = min(_round_up(bn, 128), n128)
        if bk is None:
            bk = min(1024, k128)
        bk = min(_round_up(bk, 128), k128)

        # Shrink bn/bk until the double-buffered working set fits a
        # generation-aware VMEM budget (v7x: 64 MiB/TC; v5e/v6e: 128 MiB).
        cap = _vmem_capacity_bytes()
        budget = int(0.45 * cap)
        itemsize = self.compute_dtype.itemsize

        def footprint(bm, bn_, bk_):
            return (2 * (bm * bk_ + bk_ * bn_) * itemsize   # x / w tiles (dbl-buf)
                    + 2 * bn_ * 4                           # bias tile (dbl-buf)
                    + 2 * bm * bn_ * 4                      # fp32 out tile (dbl-buf)
                    + 4 * bm * 4)                           # lse out + m/l scratch

        while footprint(self.bm_cap, bn, bk) > budget and (bk > 128 or bn > 128):
            if bk >= bn and bk > 128:
                bk = max(128, _round_up(bk // 2, 128))
            else:
                bn = max(128, _round_up(bn // 2, 128))

        self.bn, self.bk = bn, bk
        self.N_p = _round_up(OUT, bn)
        self.K_p = _round_up(IN, bk)
        self._footprint = footprint
        self._vmem_cap = cap

        # One-time layout prep (hoisted out of the per-call path): transpose to
        # [IN, OUT] for direct MXU consumption, pad to tile-aligned shapes, cast.
        wt = jnp.asarray(weight).T
        self.w_p = jnp.pad(
            wt, ((0, self.K_p - IN), (0, self.N_p - OUT))
        ).astype(self.compute_dtype)
        self.b_p = jnp.pad(
            jnp.asarray(bias, jnp.float32), (0, self.N_p - OUT)
        ).reshape(1, self.N_p)

    def __call__(self, x, *, bm=None):
        B, IN = x.shape
        assert IN == self.in_features, (IN, self.in_features)
        OUT = self.out_features
        bn, bk = self.bn, self.bk

        if bm is None:
            bm = min(self.bm_cap, _round_up(B, self._sub))
        bm = _round_up(bm, self._sub)
        M_p = _round_up(B, bm)

        x_p = jnp.pad(x, ((0, M_p - B), (0, self.K_p - IN))).astype(self.compute_dtype)

        grid = (M_p // bm, self.N_p // bn, self.K_p // bk)

        fp = self._footprint(bm, bn, bk)
        vmem_limit = int(1.5 * fp) + (4 << 20)
        vmem_limit = max(vmem_limit, 32 << 20)
        vmem_limit = min(vmem_limit, int(0.75 * self._vmem_cap))  # v7x-safe headroom

        cost = pl.CostEstimate(
            flops=2 * B * IN * OUT,
            bytes_accessed=(self.compute_dtype.itemsize * (B * IN + IN * OUT)
                            + 4 * (B * OUT + OUT)),
            transcendentals=(B * OUT if self.activate in ("tanh", "softmax") else 0),
        )

        kernel = functools.partial(
            _linear_kernel, activate=self.activate, out_valid=OUT, bn=bn)

        in_specs = [
            pl.BlockSpec((bm, bk), lambda i, j, k: (i, k)),
            pl.BlockSpec((bk, bn), lambda i, j, k: (k, j)),
            pl.BlockSpec((1, bn), lambda i, j, k: (0, j)),
        ]
        out_spec_y = pl.BlockSpec((bm, bn), lambda i, j, k: (i, j))

        if self.activate == "softmax":
            out_shape = (jax.ShapeDtypeStruct((M_p, self.N_p), jnp.float32),
                         jax.ShapeDtypeStruct((M_p, 1), jnp.float32))
            out_specs = (out_spec_y,
                         pl.BlockSpec((bm, 1), lambda i, j, k: (i, 0)))
            scratch = [pltpu.VMEM((bm, 1), jnp.float32),   # running row max
                       pltpu.VMEM((bm, 1), jnp.float32)]   # running sum-exp
            # N axis carries the online LSE state -> must stay sequential.
            dims = ("parallel", "arbitrary", "arbitrary")
        else:
            out_shape = jax.ShapeDtypeStruct((M_p, self.N_p), jnp.float32)
            out_specs = out_spec_y
            scratch = []
            dims = ("parallel", "parallel", "arbitrary")

        res = pl.pallas_call(
            kernel,
            out_shape=out_shape,
            grid=grid,
            in_specs=in_specs,
            out_specs=out_specs,
            scratch_shapes=scratch,
            compiler_params=pltpu.CompilerParams(
                dimension_semantics=dims,
                vmem_limit_bytes=vmem_limit,
            ),
            cost_estimate=cost,
        )(x_p, self.w_p, self.b_p)

        if self.activate == "softmax":
            y_p, lse = res
            # log_softmax = (x @ W^T + b) - logsumexp(row); cheap broadcast sub.
            return y_p[:B, :OUT] - lse[:B, :]
        return res[:B, :OUT]


# TODO(synk): to_ctype / to_renju_tensor are host-side ctypes export helpers with
# no TPU-kernel equivalent; only the forward pass is implemented here.


def linear_pallas(x, weight, bias, activate=None, **kw):
    """One-shot convenience wrapper (prefer PallasLinear to reuse prepped weights)."""
    return PallasLinear(weight, bias, activate, **{k: v for k, v in kw.items()
                                                   if k != "bm"})(x, bm=kw.get("bm"))


def _reference(x, weight, bias, activate):
    y = x @ weight.T + bias[None, :]
    if activate is None:
        return y
    if activate == "relu":
        return jnp.maximum(y, 0.0)
    if activate == "tanh":
        return jnp.tanh(y)
    if activate == "softmax":
        return jax.nn.log_softmax(y, axis=1)
    raise ValueError(activate)


def _make_inputs(key, B, IN, OUT):
    kx, kw, kb = jax.random.split(key, 3)
    bound = 1.0 / (IN ** 0.5)
    weight = jax.random.uniform(kw, (OUT, IN), jnp.float32, -bound, bound)
    bias = jax.random.uniform(kb, (OUT,), jnp.float32, -bound, bound)
    x = jax.random.normal(kx, (B, IN), jnp.float32)
    return x, weight, bias


if __name__ == "__main__":
    key = jax.random.PRNGKey(0)
    k_small, k_big = jax.random.split(key)
    ok = True

    # ---- small shapes matching the module's 2-D Linear forward --------------
    B, IN, OUT = 8, 32, 16
    x, w, b = _make_inputs(k_small, B, IN, OUT)
    for act in [None, "relu", "tanh", "softmax"]:
        layer = PallasLinear(w, b, activate=act)          # weight prep hoisted here
        out = jax.block_until_ready(layer(x))
        ref = _reference(x, w, b, act)
        if not jnp.allclose(out, ref, atol=1e-5, rtol=1e-5):
            ok = False
            print(f"MISMATCH (small) act={act}: "
                  f"max err {float(jnp.max(jnp.abs(out - ref)))}")

    # ---- larger shapes exercising M/N/K tiling + streaming log-softmax ------
    B2, IN2, OUT2 = 256, 512, 384
    x2, w2, b2 = _make_inputs(k_big, B2, IN2, OUT2)
    for act in [None, "relu", "softmax"]:
        layer = PallasLinear(w2, b2, activate=act, bn=128, bk=256)
        out = jax.block_until_ready(layer(x2, bm=128))
        ref = _reference(x2, w2, b2, act)
        if not jnp.allclose(out, ref, atol=1e-4, rtol=1e-4):
            ok = False
            print(f"MISMATCH (tiled) act={act}: "
                  f"max err {float(jnp.max(jnp.abs(out - ref)))}")

    # ---- opt-in bf16 MXU path (fp32 accumulation + epilogue), loose tol -----
    layer_bf16 = PallasLinear(w2, b2, activate="relu", bn=128, bk=256,
                              compute_dtype=jnp.bfloat16)
    out = jax.block_until_ready(layer_bf16(x2, bm=128))
    ref = _reference(x2, w2, b2, "relu")
    if not jnp.allclose(out, ref, atol=5e-2, rtol=5e-2):
        ok = False
        print(f"MISMATCH (bf16) max err {float(jnp.max(jnp.abs(out - ref)))}")

    if ok:
        print("KERNEL_OK")
</pallas_src>

<mosaic_0001>
module attributes {stable_mosaic.version = 11 : i64} {
  func.func @_linear_kernel(%arg0: i32, %arg1: i32, %arg2: i32, %arg3: memref<8x128xf32, #tpu.memory_space<vmem>>, %arg4: memref<128x128xf32, #tpu.memory_space<vmem>>, %arg5: memref<1x128xf32, #tpu.memory_space<vmem>>, %arg6: memref<8x128xf32, #tpu.memory_space<vmem>>) attributes {dimension_semantics = [#tpu.dimension_semantics<parallel>, #tpu.dimension_semantics<parallel>, #tpu.dimension_semantics<arbitrary>], iteration_bounds = array<i64: 1, 1, 1>, scalar_prefetch = 0 : i64, scratch_operands = 0 : i64, tpu.core_type = #tpu.core_type<tc>, window_params = [{transform_indices = @transform_0, window_bounds = array<i64: 8, 128>}, {transform_indices = @transform_1, window_bounds = array<i64: 128, 128>}, {transform_indices = @transform_2, window_bounds = array<i64: 1, 128>}, {transform_indices = @transform_3, window_bounds = array<i64: 8, 128>}]} {
    %c0_i32 = arith.constant 0 : i32
    %0 = arith.cmpi eq, %arg2, %c0_i32 : i32
    %1 = arith.extui %0 : i1 to i32
    %c0_i32_0 = arith.constant 0 : i32
    %2 = arith.cmpi ne, %1, %c0_i32_0 : i32
    scf.if %2 {
      %cst_10 = arith.constant 0.000000e+00 : f32
      %12 = vector.broadcast %cst_10 : f32 to vector<8x128xf32>
      %c0_11 = arith.constant 0 : index
      %c0_12 = arith.constant 0 : index
      %13 = vector.load %arg6[%c0_11, %c0_12] : memref<8x128xf32, #tpu.memory_space<vmem>>, vector<8x128xf32>
      tpu.vector_store %arg6[%c0_11, %c0_12], %12 {strides = array<i32>} : memref<8x128xf32, #tpu.memory_space<vmem>>, vector<8x128xf32>,
    } else {
    }
    %c0 = arith.constant 0 : index
    %c0_1 = arith.constant 0 : index
    %3 = vector.load %arg6[%c0, %c0_1] : memref<8x128xf32, #tpu.memory_space<vmem>>, vector<8x128xf32>
    %c0_2 = arith.constant 0 : index
    %c0_3 = arith.constant 0 : index
    %4 = vector.load %arg3[%c0_2, %c0_3] : memref<8x128xf32, #tpu.memory_space<vmem>>, vector<8x128xf32>
    %c0_4 = arith.constant 0 : index
    %c0_5 = arith.constant 0 : index
    %5 = vector.load %arg4[%c0_4, %c0_5] : memref<128x128xf32, #tpu.memory_space<vmem>>, vector<128x128xf32>
    %cst = arith.constant dense<0.000000e+00> : vector<8x128xf32>
    %6 = tpu.matmul %4, %5, %cst {dimension_numbers = #tpu.dot_dimension_numbers<[1], [0], [0], [1], [0, 0, 1, 1], [], []>} : vector<8x128xf32>, vector<128x128xf32>, vector<8x128xf32> -> vector<8x128xf32>
    %7 = arith.addf %3, %6 : vector<8x128xf32>
    %c0_6 = arith.constant 0 : index
    %c0_7 = arith.constant 0 : index
    %8 = vector.load %arg6[%c0_6, %c0_7] : memref<8x128xf32, #tpu.memory_space<vmem>>, vector<8x128xf32>
    tpu.vector_store %arg6[%c0_6, %c0_7], %7 {strides = array<i32>} : memref<8x128xf32, #tpu.memory_space<vmem>>, vector<8x128xf32>,
    %c0_i32_8 = arith.constant 0 : i32
    %9 = arith.cmpi eq, %arg2, %c0_i32_8 : i32
    %10 = arith.extui %9 : i1 to i32
    %c0_i32_9 = arith.constant 0 : i32
    %11 = arith.cmpi ne, %10, %c0_i32_9 : i32
    scf.if %11 {
      %c0_10 = arith.constant 0 : index
      %c0_11 = arith.constant 0 : index
      %12 = vector.load %arg6[%c0_10, %c0_11] : memref<8x128xf32, #tpu.memory_space<vmem>>, vector<8x128xf32>
      %c0_12 = arith.constant 0 : index
      %c0_13 = arith.constant 0 : index
      %13 = vector.load %arg5[%c0_12, %c0_13] : memref<1x128xf32, #tpu.memory_space<vmem>>, vector<1x128xf32>
      %14 = vector.broadcast %13 : vector<1x128xf32> to vector<8x128xf32>
      %15 = arith.addf %12, %14 : vector<8x128xf32>
      %c0_14 = arith.constant 0 : index
      %c0_15 = arith.constant 0 : index
      %16 = vector.load %arg6[%c0_14, %c0_15] : memref<8x128xf32, #tpu.memory_space<vmem>>, vector<8x128xf32>
      tpu.vector_store %arg6[%c0_14, %c0_15], %15 {strides = array<i32>} : memref<8x128xf32, #tpu.memory_space<vmem>>, vector<8x128xf32>,
    } else {
    }
    return
  }
  func.func @transform_0(%arg0: i32, %arg1: i32, %arg2: i32) -> (i32, i32) {
    %c0_i32 = arith.constant 0 : i32
    return %arg0, %arg2 : i32, i32
  }
  func.func @transform_1(%arg0: i32, %arg1: i32, %arg2: i32) -> (i32, i32) {
    %c0_i32 = arith.constant 0 : i32
    return %arg2, %arg1 : i32, i32
  }
  func.func @transform_2(%arg0: i32, %arg1: i32, %arg2: i32) -> (i32, i32) {
    %c0_i32 = arith.constant 0 : i32
    %c0_i32_0 = arith.constant 0 : i32
    return %c0_i32, %arg1 : i32, i32
  }
  func.func @transform_3(%arg0: i32, %arg1: i32, %arg2: i32) -> (i32, i32) {
    %c0_i32 = arith.constant 0 : i32
    return %arg0, %arg1 : i32, i32
  }
}

</mosaic_0001>

<llo_original>
// kernel: tpu_custom_call.1
$region0: #{tpu_custom_call.1}
  #allocation0 [shape = 'u32[]', space=smem, size = 0x4, offset = 0x4, fixed_abs, tag = 'smem constant byte address 0x4 - core index']
  #allocation1 [shape = 'u32[144,128]{1,0:T(1,128)}', space=vmem, size = 0x12000, scoped, tag = 'internal scratch']
  %s0 = inlined_call_operand.hbm [shape: f32[8,128], index: 0, kind: input, shape index: {}]
  %s1 = inlined_call_operand.hbm [shape: f32[128,128], index: 1, kind: input, shape index: {}]
  %s2 = inlined_call_operand.vmem [shape: f32[1,128], index: 2, kind: input, shape index: {}]
  %s3 = inlined_call_operand.hbm [shape: f32[8,128], index: 3, kind: output, shape index: {}]
  %s4 = sld [smem:[#allocation0]]
  $region38: #{tpu_custom_call.1} parent=0
    _
  %s6 = ssub.s32 1, %s4
  %s7 = scalar_select 0, %s6, %s4
  $region1: #{tpu_custom_call.1} parent=0
    #allocation2 [shape = 'u8[4096]{0}', space=vmem, size = 0x1000, scoped, tag = 'input window, operand 0, single buffered']
    #allocation3 [shape = 's32[1]{0}', space=sflag, size = 0x4, scoped, tag = 'scoped memory for tpu_custom_call.1']
    #allocation4 [shape = 's32[1]{0}', space=sflag, size = 0x4, scoped, tag = 'scoped memory for tpu_custom_call.1']
    #allocation5 [shape = 'u8[65536]{0}', space=vmem, size = 0x10000, scoped, tag = 'input window, operand 1, single buffered']
    #allocation6 [shape = 's32[1]{0}', space=sflag, size = 0x4, scoped, tag = 'scoped memory for tpu_custom_call.1']
    #allocation7 [shape = 'u8[4096]{0}', space=vmem, size = 0x1000, scoped, tag = 'output window, operand 0, single buffered']
    %8 = vsyncpa [#allocation3], 0
    %9 = vsyncpa [#allocation6], 0
    %10 = vsyncpa [#allocation4], 0
    // Predicated region
    $region2: #{tpu_custom_call.1} parent=1 // pred_check
      _
    $region3: #{tpu_custom_call.1} parent=1 // pred_check_branch
      %12 = sbr.rel (0) target = $region5
    $region4: #{tpu_custom_call.1} parent=1 // pred_region
      %s14 = ssub.s32 128, 128
      %15 = vsyncadd [#allocation3], %s14
      %s17 = sshll.u32 [#allocation2], 4
      %s18 = int_to_ptr.vmem [resolvable:$true] %s17
      %20 = dma.hbm_to_vmem [thread:$0]  %s0, 128, %s18, [#allocation3]
    $region5: #{tpu_custom_call.1} parent=1 // pred_fallthru
      _
    // Predicated region
    $region6: #{tpu_custom_call.1} parent=1 // pred_check
      _
    $region7: #{tpu_custom_call.1} parent=1 // pred_check_branch
      %22 = sbr.rel (0) target = $region9
    $region8: #{tpu_custom_call.1} parent=1 // pred_region
      %s24 = ssub.s32 2048, 2048
      %25 = vsyncadd [#allocation6], %s24
      %s26 = sshll.u32 [#allocation5], 4
      %s27 = int_to_ptr.vmem [resolvable:$true] %s26
      %32 = dma.hbm_to_vmem [thread:$0]  %s1, 2048, %s27, [#allocation6], 128, 128, 8
    $region9: #{tpu_custom_call.1} parent=1 // pred_fallthru
      _
    // Predicated region
    $region10: #{tpu_custom_call.1} parent=1 // pred_check
      _
    $region11: #{tpu_custom_call.1} parent=1 // pred_check_branch
      %34 = sbr.rel (0) target = $region13
    $region12: #{tpu_custom_call.1} parent=1 // pred_region
      _
    $region13: #{tpu_custom_call.1} parent=1 // pred_fallthru
      _
    // Predicated region
    $region14: #{tpu_custom_call.1} parent=1 // pred_check
      _
    $region15: #{tpu_custom_call.1} parent=1 // pred_check_branch
      %36 = sbr.rel (0) target = $region17
    $region16: #{tpu_custom_call.1} parent=1 // pred_region
      %37 = dma.done [#allocation3], 128
    $region17: #{tpu_custom_call.1} parent=1 // pred_fallthru
      _
    // Predicated region
    $region18: #{tpu_custom_call.1} parent=1 // pred_check
      _
    $region19: #{tpu_custom_call.1} parent=1 // pred_check_branch
      %39 = sbr.rel (0) target = $region21
    $region20: #{tpu_custom_call.1} parent=1 // pred_region
      %40 = dma.done [#allocation6], 2048
    $region21: #{tpu_custom_call.1} parent=1 // pred_fallthru
      _
    %p41 = scmp.eq.s32.totalorder 0, 0
    // Predicated region
    $region22: #{tpu_custom_call.1} parent=1 // pred_check
      %p42 = pneg %p41
    $region23: #{tpu_custom_call.1} parent=1 // pred_check_branch
      %44 = sbr.rel (%p42) target = $region25
    $region24: #{tpu_custom_call.1} parent=1 // pred_region
      %45 = vst [vmem:[#allocation7] sm:$0xff] 0.0
    $region25: #{tpu_custom_call.1} parent=1 // pred_fallthru
      _
    %v46 = vld [vmem:[#allocation7] sm:$0xff]
    %v47 = vld [vmem:[#allocation2] sm:$0xff]
    %v48 = vld [vmem:[#allocation5] sm:$0xff]
    %v49 = vld [vmem:[#allocation5 + $0x8] sm:$0xff]
    %v50 = vld [vmem:[#allocation5 + $0x10] sm:$0xff]
    %v51 = vld [vmem:[#allocation5 + $0x18] sm:$0xff]
    %v52 = vld [vmem:[#allocation5 + $0x20] sm:$0xff]
    %v53 = vld [vmem:[#allocation5 + $0x28] sm:$0xff]
    %v54 = vld [vmem:[#allocation5 + $0x30] sm:$0xff]
    %v55 = vld [vmem:[#allocation5 + $0x38] sm:$0xff]
    %v56 = vld [vmem:[#allocation5 + $0x40] sm:$0xff]
    %v57 = vld [vmem:[#allocation5 + $0x48] sm:$0xff]
    %v58 = vld [vmem:[#allocation5 + $0x50] sm:$0xff]
    %v59 = vld [vmem:[#allocation5 + $0x58] sm:$0xff]
    %v60 = vld [vmem:[#allocation5 + $0x60] sm:$0xff]
    %v61 = vld [vmem:[#allocation5 + $0x68] sm:$0xff]
    %v62 = vld [vmem:[#allocation5 + $0x70] sm:$0xff]
    %v63 = vld [vmem:[#allocation5 + $0x78] sm:$0xff]
    %64 = vmatprep.subr.mxu0 0.0
    %65 = vmatpush1.msra.mxu0 %v48
    %66 = vmatprep.subr.mxu0 0.0
    %67 = vmatpush1.msra.mxu0 %v49
    %68 = vmatprep.subr.mxu0 0.0
    %69 = vmatpush1.msra.mxu0 %v50
    %70 = vmatprep.subr.mxu0 0.0
    %71 = vmatpush1.msra.mxu0 %v51
    %72 = vmatprep.subr.mxu0 0.0
    %73 = vmatpush1.msra.mxu0 %v52
    %74 = vmatprep.subr.mxu0 0.0
    %75 = vmatpush1.msra.mxu0 %v53
    %76 = vmatprep.subr.mxu0 0.0
    %77 = vmatpush1.msra.mxu0 %v54
    %78 = vmatprep.subr.mxu0 0.0
    %79 = vmatpush1.msra.mxu0 %v55
    %80 = vmatprep.subr.mxu0 0.0
    %81 = vmatpush1.msra.mxu0 %v56
    %82 = vmatprep.subr.mxu0 0.0
    %83 = vmatpush1.msra.mxu0 %v57
    %84 = vmatprep.subr.mxu0 0.0
    %85 = vmatpush1.msra.mxu0 %v58
    %86 = vmatprep.subr.mxu0 0.0
    %87 = vmatpush1.msra.mxu0 %v59
    %88 = vmatprep.subr.mxu0 0.0
    %89 = vmatpush1.msra.mxu0 %v60
    %90 = vmatprep.subr.mxu0 0.0
    %91 = vmatpush1.msra.mxu0 %v61
    %92 = vmatprep.subr.mxu0 0.0
    %93 = vmatpush1.msra.mxu0 %v62
    %94 = vmatprep.subr.mxu0 0.0
    %95 = vmatpush1.msra.mxu0 %v63
    %96 = vmatprep.subr.mxu0 0.0
    %97 = vmatpush1.msra.mxu0 0.0
    %98 = vmatprep.subr.mxu0 0.0
    %99 = vmatpush1.msra.mxu0 0.0
    %100 = vmatprep.subr.mxu0 0.0
    %101 = vmatpush1.msra.mxu0 0.0
    %102 = vmatprep.subr.mxu0 0.0
    %103 = vmatpush1.msra.mxu0 0.0
    %104 = vmatprep.subr.mxu0 0.0
    %105 = vmatpush1.msra.mxu0 0.0
    %106 = vmatprep.subr.mxu0 0.0
    %107 = vmatpush1.msra.mxu0 0.0
    %108 = vmatprep.subr.mxu0 0.0
    %109 = vmatpush1.msra.mxu0 0.0
    %110 = vmatprep.subr.mxu0 0.0
    %111 = vmatpush1.msra.mxu0 0.0
    %112 = vmatprep.subr.mxu0 0.0
    %113 = vmatpush1.msra.mxu0 0.0
    %114 = vmatprep.subr.mxu0 0.0
    %115 = vmatpush1.msra.mxu0 0.0
    %116 = vmatprep.subr.mxu0 0.0
    %117 = vmatpush1.msra.mxu0 0.0
    %118 = vmatprep.subr.mxu0 0.0
    %119 = vmatpush1.msra.mxu0 0.0
    %120 = vmatprep.subr.mxu0 0.0
    %121 = vmatpush1.msra.mxu0 0.0
    %122 = vmatprep.subr.mxu0 0.0
    %123 = vmatpush1.msra.mxu0 0.0
    %124 = vmatprep.subr.mxu0 0.0
    %125 = vmatpush1.msra.mxu0 0.0
    %126 = vmatprep.subr.mxu0 0.0
    %127 = vmatpush1.msra.mxu0 0.0
    %128 = vmatprep.mubr.f32.mxu0 0.0
    %129 = vmatmul.mubr.f32.gmra.mrb[0].mxu0 %v47
    %v130 = vpop.f32.mrb[0].mxu0
    %v131 = vadd.f32 0.0, %v130
    %v132 = vpop.f32.mrb[0].mxu0
    %133 = vdwg.mxu0
    %v134 = vadd.f32 %v46, %v131
    %135 = vst [vmem:[#allocation7] sm:$0xff] %v134
    // Predicated region
    $region26: #{tpu_custom_call.1} parent=1 // pred_check
      %p136 = pneg %p41
    $region27: #{tpu_custom_call.1} parent=1 // pred_check_branch
      %138 = sbr.rel (%p136) target = $region29
    $region28: #{tpu_custom_call.1} parent=1 // pred_region
      %v139 = vld [vmem:[#allocation7] sm:$0xff]
      %v140 = vld [vmem:[%s2] sm:$0x1]
      %v142 = vlaneseq
      %v143 = vshrl.u32 %v142, 7
      %v144 = vsub.s32 0, %v143
      %v145 = vrot.slane %v140, %v144
      %v147 = vadd.f32 %v139, %v145
      %148 = vst [vmem:[#allocation7] sm:$0xff] %v147
    $region29: #{tpu_custom_call.1} parent=1 // pred_fallthru
      _
    // Predicated region
    $region30: #{tpu_custom_call.1} parent=1 // pred_check
      _
    $region31: #{tpu_custom_call.1} parent=1 // pred_check_branch
      %150 = sbr.rel (0) target = $region33
    $region32: #{tpu_custom_call.1} parent=1 // pred_region
      %s152 = ssub.s32 128, 128
      %153 = vsyncadd [#allocation4], %s152
      %s155 = sshll.u32 [#allocation7], 4
      %s156 = int_to_ptr.vmem [resolvable:$true] %s155
      %158 = dma.vmem_to_hbm [thread:$0]  %s156, 128, %s3, [#allocation4]
    $region33: #{tpu_custom_call.1} parent=1 // pred_fallthru
      _
    // Predicated region
    $region34: #{tpu_custom_call.1} parent=1 // pred_check
      _
    $region35: #{tpu_custom_call.1} parent=1 // pred_check_branch
      %160 = sbr.rel (0) target = $region37
    $region36: #{tpu_custom_call.1} parent=1 // pred_region
      %161 = dma.done [#allocation4], 128
    $region37: #{tpu_custom_call.1} parent=1 // pred_fallthru
      _
    %162 = vsyncpa [#allocation3], 1
    %163 = vsyncpa [#allocation6], 1
    %164 = vsyncpa [#allocation4], 1

</llo_original>
